<compile_context>
chip_gen: v5e
topology: v5e:2x2
jax: 0.10.0
libtpu: 0.0.40
codegen_flags: <defaults>
</compile_context>

<pallas_src>
import jax
import jax.numpy as jnp
from jax.experimental import pallas as pl
from jax.experimental.pallas import tpu as pltpu


def convgru_kernel(xproj_ref, wzr_ref, wq_ref, out_ref, hpad_scr):
    # xproj_ref: (1, Tc, H, 3*WC)  lane-dense x-projections, lanes = [z|r|q] slabs
    # wzr_ref  : (3*WC, 2*WC)      block-banded hidden weights for fused z|r
    # wq_ref   : (3*WC, WC)        block-banded hidden weights for q
    # out_ref  : (1, Tc, H, WC)    lane-dense output slab
    # hpad_scr : (8 + H + 8, WC)   persistent hidden carry; rows 0..7 / 8+H.. stay 0
    Tc, H = xproj_ref.shape[1], xproj_ref.shape[2]
    WC = out_ref.shape[3]
    PAD = 8

    # Start of this batch element's sequence: h0 = 0 and zero y-halo.
    @pl.when(pl.program_id(1) == 0)
    def _():
        hpad_scr[...] = jnp.zeros(hpad_scr.shape, hpad_scr.dtype)

    w_zr = wzr_ref[...]
    w_q = wq_ref[...]

    def im2col_y():
        # Three vreg-aligned (H, WC) slabs (rows shifted by -1/0/+1) -> (H, 3*WC).
        return jnp.concatenate(
            [hpad_scr[PAD - 1 + ky:PAD - 1 + ky + H, :] for ky in range(3)],
            axis=-1)

    # Tc is small & static -> trace-time unrolled loop (all ref slices static).
    for t in range(Tc):
        xp = xproj_ref[0, t]                          # (H, 3*WC)
        h_prev = hpad_scr[PAD:PAD + H, :]             # (H, WC) lane-dense slab

        # Fused z|r gates: one lane-dense matmul, K = 3*WC, N = 2*WC.
        zr = jax.nn.sigmoid(
            jnp.dot(im2col_y(), w_zr, preferred_element_type=jnp.float32)
            + xp[:, :2 * WC])
        z = zr[:, :WC]                                # vreg-boundary slices
        r = zr[:, WC:]

        # q gate over r * h_prev (staged in the same padded carry buffer).
        hpad_scr[PAD:PAD + H, :] = r * h_prev
        q = jnp.tanh(
            jnp.dot(im2col_y(), w_q, preferred_element_type=jnp.float32)
            + xp[:, 2 * WC:])

        h_new = (1.0 - z) * h_prev + z * q            # (H, WC)
        hpad_scr[PAD:PAD + H, :] = h_new              # carry to next step / chunk
        out_ref[0, t] = h_new.astype(out_ref.dtype)   # unmasked lane-dense store


def conv_gru(x, wz, bz, wr, br, wq, bq, *, t_chunk=None):
    """ConvGRU forward. x: (B, T, H, W, Cin) f32 -> (B, T, H, W, Ch) f32."""
    B, T, H, W, Cin = x.shape
    Ch = wz.shape[-1]
    WC = W * Ch
    if t_chunk is None:
        t_chunk = T
    assert T % t_chunk == 0
    # Lane-dense layout wants WC % 128 == 0 (still correct otherwise, just masked
    # stores). Demo: W=16, Ch=8 -> WC=128.

    # ---- x-projection for all gates, hoisted out of the kernel (plain XLA conv) ----
    def xconv(w, b):
        wk = w[:, :Cin, :].reshape(3, 3, Cin, Ch)          # HWIO
        y = jax.lax.conv_general_dilated(
            x.reshape(B * T, H, W, Cin), wk, (1, 1), 'SAME',
            dimension_numbers=('NHWC', 'HWIO', 'NHWC'))
        return (y + b.reshape(1, 1, 1, Ch)).reshape(B, T, H, WC)

    xproj = jnp.concatenate([xconv(wz, bz), xconv(wr, br), xconv(wq, bq)],
                            axis=-1)                        # (B, T, H, 3*WC)

    # ---- block-banded hidden weights: fold the 3x3 x-taps + channel mix into a
    #      lane-dense (W*Ch, W*Cout) band; rows stacked over the 3 y-taps. ----
    def band(wh):                                           # wh: (9, Ch, Ch)
        whk = wh.reshape(3, 3, Ch, Ch)                      # [ky, kx, ci, co]
        sel = (jnp.arange(W)[None, :, None] - jnp.arange(W)[None, None, :] + 1
               == jnp.arange(3)[:, None, None]).astype(x.dtype)   # (kx, xi, xo)
        big = jnp.einsum('kio,ykcd->yicod', sel, whk)       # (ky, xi, ci, xo, co)
        return big.reshape(3, WC, WC)

    w_zr = jnp.concatenate([band(wz[:, Cin:, :]), band(wr[:, Cin:, :])],
                           axis=-1).reshape(3 * WC, 2 * WC)
    w_q = band(wq[:, Cin:, :]).reshape(3 * WC, WC)

    n_tc = T // t_chunk
    cost = pl.CostEstimate(
        flops=2 * B * T * H * (3 * WC) * (3 * WC),
        transcendentals=3 * B * T * H * WC,
        bytes_accessed=4 * (B * T * H * 4 * WC + 3 * WC * 3 * WC),
    )

    out = pl.pallas_call(
        convgru_kernel,
        out_shape=jax.ShapeDtypeStruct((B, T, H, WC), x.dtype),
        grid_spec=pltpu.PrefetchScalarGridSpec(
            num_scalar_prefetch=0,
            grid=(B, n_tc),                      # batch parallel, T chunked
            in_specs=[
                pl.BlockSpec((1, t_chunk, H, 3 * WC), lambda b, c: (b, c, 0, 0)),
                pl.BlockSpec((3 * WC, 2 * WC), lambda b, c: (0, 0)),
                pl.BlockSpec((3 * WC, WC), lambda b, c: (0, 0)),
            ],
            out_specs=pl.BlockSpec((1, t_chunk, H, WC), lambda b, c: (b, c, 0, 0)),
            scratch_shapes=[
                pltpu.VMEM((8 + H + 8, WC), jnp.float32),   # padded hidden carry
            ],
        ),
        compiler_params=pltpu.CompilerParams(
            dimension_semantics=("parallel", "arbitrary"),
            vmem_limit_bytes=32 * 1024 * 1024),
        cost_estimate=cost,
    )(xproj, w_zr, w_q)
    return out.reshape(B, T, H, W, Ch)


def conv_gru_ref(x, wz, bz, wr, br, wq, bq):
    """Pure-JAX reference (matches PyTorch ConvGRU semantics, NHWC layout)."""
    B, T, H, W, Cin = x.shape
    Ch = wz.shape[-1]
    Ct = Cin + Ch

    def conv(inp, w, b):
        out = jax.lax.conv_general_dilated(
            inp, w.reshape(3, 3, Ct, Ch), (1, 1), 'SAME',
            dimension_numbers=('NHWC', 'HWIO', 'NHWC'))
        return out + b.reshape(1, 1, 1, Ch)

    h = jnp.zeros((B, H, W, Ch), x.dtype)
    outs = []
    for t in range(T):
        xt = x[:, t]
        comb = jnp.concatenate([xt, h], axis=-1)
        z = jax.nn.sigmoid(conv(comb, wz, bz))
        r = jax.nn.sigmoid(conv(comb, wr, br))
        comb_r = jnp.concatenate([xt, r * h], axis=-1)
        q = jnp.tanh(conv(comb_r, wq, bq))
        h = (1.0 - z) * h + z * q
        outs.append(h)
    return jnp.stack(outs, axis=1)


if __name__ == "__main__":
    B, T, Cin, Ch, H, W = 2, 4, 4, 8, 16, 16
    Ct = Cin + Ch

    key = jax.random.PRNGKey(0)
    ks = jax.random.split(key, 8)

    # Deterministic synthetic parameters (same role/shapes as the nn.Conv2d
    # weights+biases, stored as (ky*3+kx, Cin+Ch, Ch) matrices and (1, Ch)
    # biases; input-channel order [x, h]).
    scale = 0.3
    wz = jax.random.normal(ks[1], (9, Ct, Ch), jnp.float32) * scale
    bz = jax.random.normal(ks[2], (1, Ch), jnp.float32) * scale
    wr = jax.random.normal(ks[3], (9, Ct, Ch), jnp.float32) * scale
    br = jax.random.normal(ks[4], (1, Ch), jnp.float32) * scale
    wq = jax.random.normal(ks[5], (9, Ct, Ch), jnp.float32) * scale
    bq = jax.random.normal(ks[6], (1, Ch), jnp.float32) * scale

    # Input in PyTorch layout (B, T, C, H, W) -> kernel layout (B, T, H, W, C).
    x_nchw = jax.random.normal(ks[0], (B, T, Cin, H, W), jnp.float32) * 0.5
    x = jnp.transpose(x_nchw, (0, 1, 3, 4, 2))

    out = conv_gru(x, wz, bz, wr, br, wq, bq, t_chunk=2)
    out = jax.block_until_ready(out)

    ref = conv_gru_ref(x, wz, bz, wr, br, wq, bq)
    err = float(jnp.max(jnp.abs(out - ref)))
    assert jnp.allclose(out, ref, atol=1e-3, rtol=1e-3), f"max abs err = {err}"

    # (transpose out to (B, T, Ch, H, W) to recover the PyTorch output layout.)
    print("KERNEL_OK")
</pallas_src>

<mosaic_0001>
module attributes {stable_mosaic.version = 11 : i64} {
  func.func @convgru_kernel(%arg0: i32, %arg1: i32, %arg2: memref<1x2x16x384xf32, #tpu.memory_space<vmem>>, %arg3: memref<384x256xf32, #tpu.memory_space<vmem>>, %arg4: memref<384x128xf32, #tpu.memory_space<vmem>>, %arg5: memref<1x2x16x128xf32, #tpu.memory_space<vmem>>, %arg6: memref<32x128xf32, #tpu.memory_space<vmem>>) attributes {dimension_semantics = [#tpu.dimension_semantics<parallel>, #tpu.dimension_semantics<arbitrary>], iteration_bounds = array<i64: 2, 2>, scalar_prefetch = 0 : i64, scratch_operands = 1 : i64, tpu.core_type = #tpu.core_type<tc>, window_params = [{transform_indices = @transform_0, window_bounds = array<i64: 1, 2, 16, 384>}, {pipeline_mode = #tpu.pipeline_mode<synchronous>, transform_indices = @transform_1, window_bounds = array<i64: 384, 256>}, {pipeline_mode = #tpu.pipeline_mode<synchronous>, transform_indices = @transform_2, window_bounds = array<i64: 384, 128>}, {transform_indices = @transform_3, window_bounds = array<i64: 1, 2, 16, 128>}]} {
    %c0_i32 = arith.constant 0 : i32
    %0 = arith.cmpi eq, %arg1, %c0_i32 : i32
    %1 = arith.extui %0 : i1 to i32
    %c0_i32_0 = arith.constant 0 : i32
    %2 = arith.cmpi ne, %1, %c0_i32_0 : i32
    scf.if %2 {
      %cst_59 = arith.constant 0.000000e+00 : f32
      %77 = vector.broadcast %cst_59 : f32 to vector<32x128xf32>
      %c0_60 = arith.constant 0 : index
      %c0_61 = arith.constant 0 : index
      %78 = vector.load %arg6[%c0_60, %c0_61] : memref<32x128xf32, #tpu.memory_space<vmem>>, vector<32x128xf32>
      tpu.vector_store %arg6[%c0_60, %c0_61], %77 {strides = array<i32>} : memref<32x128xf32, #tpu.memory_space<vmem>>, vector<32x128xf32>,
    } else {
    }
    %c0 = arith.constant 0 : index
    %c0_1 = arith.constant 0 : index
    %3 = vector.load %arg3[%c0, %c0_1] : memref<384x256xf32, #tpu.memory_space<vmem>>, vector<384x256xf32>
    %c0_2 = arith.constant 0 : index
    %c0_3 = arith.constant 0 : index
    %4 = vector.load %arg4[%c0_2, %c0_3] : memref<384x128xf32, #tpu.memory_space<vmem>>, vector<384x128xf32>
    %c0_4 = arith.constant 0 : index
    %c0_5 = arith.constant 0 : index
    %c0_6 = arith.constant 0 : index
    %c0_7 = arith.constant 0 : index
    %5 = vector.load %arg2[%c0_4, %c0_5, %c0_6, %c0_7] : memref<1x2x16x384xf32, #tpu.memory_space<vmem>>, vector<1x1x16x384xf32>
    %6 = vector.shape_cast %5 : vector<1x1x16x384xf32> to vector<16x384xf32>
    %c8 = arith.constant 8 : index
    %c0_8 = arith.constant 0 : index
    %7 = vector.load %arg6[%c8, %c0_8] : memref<32x128xf32, #tpu.memory_space<vmem>>, vector<16x128xf32>
    %c7 = arith.constant 7 : index
    %c0_9 = arith.constant 0 : index
    %8 = vector.load %arg6[%c7, %c0_9] : memref<32x128xf32, #tpu.memory_space<vmem>>, vector<16x128xf32>
    %c8_10 = arith.constant 8 : index
    %c0_11 = arith.constant 0 : index
    %9 = vector.load %arg6[%c8_10, %c0_11] : memref<32x128xf32, #tpu.memory_space<vmem>>, vector<16x128xf32>
    %c9 = arith.constant 9 : index
    %c0_12 = arith.constant 0 : index
    %10 = vector.load %arg6[%c9, %c0_12] : memref<32x128xf32, #tpu.memory_space<vmem>>, vector<16x128xf32>
    %11 = tpu.concatenate %8, %9, %10 in 1 : vector<16x128xf32>, vector<16x128xf32>, vector<16x128xf32> -> vector<16x384xf32>
    %cst = arith.constant dense<0.000000e+00> : vector<16x256xf32>
    %12 = tpu.matmul %11, %3, %cst {dimension_numbers = #tpu.dot_dimension_numbers<[1], [0], [0], [1], [0, 0, 1, 1], [], []>} : vector<16x384xf32>, vector<384x256xf32>, vector<16x256xf32> -> vector<16x256xf32>
    %13 = vector.extract_strided_slice %6 {offsets = [0, 0], sizes = [16, 256], strides = [1, 1]} : vector<16x384xf32> to vector<16x256xf32>
    %14 = arith.addf %12, %13 : vector<16x256xf32>
    %15 = arith.negf %14 : vector<16x256xf32>
    %16 = math.exp %15 : vector<16x256xf32>
    %cst_13 = arith.constant 1.000000e+00 : f32
    %17 = vector.broadcast %cst_13 : f32 to vector<16x256xf32>
    %18 = arith.addf %17, %16 : vector<16x256xf32>
    %19 = arith.divf %17, %18 : vector<16x256xf32>
    %20 = vector.extract_strided_slice %19 {offsets = [0, 0], sizes = [16, 128], strides = [1, 1]} : vector<16x256xf32> to vector<16x128xf32>
    %21 = vector.extract_strided_slice %19 {offsets = [0, 128], sizes = [16, 128], strides = [1, 1]} : vector<16x256xf32> to vector<16x128xf32>
    %22 = arith.mulf %21, %7 : vector<16x128xf32>
    %c8_14 = arith.constant 8 : index
    %c0_15 = arith.constant 0 : index
    %23 = vector.load %arg6[%c8_14, %c0_15] : memref<32x128xf32, #tpu.memory_space<vmem>>, vector<16x128xf32>
    tpu.vector_store %arg6[%c8_14, %c0_15], %22 {strides = array<i32>} : memref<32x128xf32, #tpu.memory_space<vmem>>, vector<16x128xf32>,
    %c7_16 = arith.constant 7 : index
    %c0_17 = arith.constant 0 : index
    %24 = vector.load %arg6[%c7_16, %c0_17] : memref<32x128xf32, #tpu.memory_space<vmem>>, vector<16x128xf32>
    %c8_18 = arith.constant 8 : index
    %c0_19 = arith.constant 0 : index
    %25 = vector.load %arg6[%c8_18, %c0_19] : memref<32x128xf32, #tpu.memory_space<vmem>>, vector<16x128xf32>
    %c9_20 = arith.constant 9 : index
    %c0_21 = arith.constant 0 : index
    %26 = vector.load %arg6[%c9_20, %c0_21] : memref<32x128xf32, #tpu.memory_space<vmem>>, vector<16x128xf32>
    %27 = tpu.concatenate %24, %25, %26 in 1 : vector<16x128xf32>, vector<16x128xf32>, vector<16x128xf32> -> vector<16x384xf32>
    %cst_22 = arith.constant dense<0.000000e+00> : vector<16x128xf32>
    %28 = tpu.matmul %27, %4, %cst_22 {dimension_numbers = #tpu.dot_dimension_numbers<[1], [0], [0], [1], [0, 0, 1, 1], [], []>} : vector<16x384xf32>, vector<384x128xf32>, vector<16x128xf32> -> vector<16x128xf32>
    %29 = vector.extract_strided_slice %6 {offsets = [0, 256], sizes = [16, 128], strides = [1, 1]} : vector<16x384xf32> to vector<16x128xf32>
    %30 = arith.addf %28, %29 : vector<16x128xf32>
    %31 = math.tanh %30 : vector<16x128xf32>
    %cst_23 = arith.constant 1.000000e+00 : f32
    %32 = vector.broadcast %cst_23 : f32 to vector<16x128xf32>
    %33 = arith.subf %32, %20 : vector<16x128xf32>
    %34 = arith.mulf %33, %7 : vector<16x128xf32>
    %35 = arith.mulf %20, %31 : vector<16x128xf32>
    %36 = arith.addf %34, %35 : vector<16x128xf32>
    %c8_24 = arith.constant 8 : index
    %c0_25 = arith.constant 0 : index
    %37 = vector.load %arg6[%c8_24, %c0_25] : memref<32x128xf32, #tpu.memory_space<vmem>>, vector<16x128xf32>
    tpu.vector_store %arg6[%c8_24, %c0_25], %36 {strides = array<i32>} : memref<32x128xf32, #tpu.memory_space<vmem>>, vector<16x128xf32>,
    %c0_26 = arith.constant 0 : index
    %c0_27 = arith.constant 0 : index
    %c0_28 = arith.constant 0 : index
    %c0_29 = arith.constant 0 : index
    %38 = vector.load %arg5[%c0_26, %c0_27, %c0_28, %c0_29] : memref<1x2x16x128xf32, #tpu.memory_space<vmem>>, vector<1x1x16x128xf32>
    %39 = vector.shape_cast %38 : vector<1x1x16x128xf32> to vector<16x128xf32>
    %40 = vector.shape_cast %36 : vector<16x128xf32> to vector<1x1x16x128xf32>
    tpu.vector_store %arg5[%c0_26, %c0_27, %c0_28, %c0_29], %40 {strides = array<i32>} : memref<1x2x16x128xf32, #tpu.memory_space<vmem>>, vector<1x1x16x128xf32>,
    %c0_30 = arith.constant 0 : index
    %c1 = arith.constant 1 : index
    %c0_31 = arith.constant 0 : index
    %c0_32 = arith.constant 0 : index
    %41 = vector.load %arg2[%c0_30, %c1, %c0_31, %c0_32] : memref<1x2x16x384xf32, #tpu.memory_space<vmem>>, vector<1x1x16x384xf32>
    %42 = vector.shape_cast %41 : vector<1x1x16x384xf32> to vector<16x384xf32>
    %c8_33 = arith.constant 8 : index
    %c0_34 = arith.constant 0 : index
    %43 = vector.load %arg6[%c8_33, %c0_34] : memref<32x128xf32, #tpu.memory_space<vmem>>, vector<16x128xf32>
    %c7_35 = arith.constant 7 : index
    %c0_36 = arith.constant 0 : index
    %44 = vector.load %arg6[%c7_35, %c0_36] : memref<32x128xf32, #tpu.memory_space<vmem>>, vector<16x128xf32>
    %c8_37 = arith.constant 8 : index
    %c0_38 = arith.constant 0 : index
    %45 = vector.load %arg6[%c8_37, %c0_38] : memref<32x128xf32, #tpu.memory_space<vmem>>, vector<16x128xf32>
    %c9_39 = arith.constant 9 : index
    %c0_40 = arith.constant 0 : index
    %46 = vector.load %arg6[%c9_39, %c0_40] : memref<32x128xf32, #tpu.memory_space<vmem>>, vector<16x128xf32>
    %47 = tpu.concatenate %44, %45, %46 in 1 : vector<16x128xf32>, vector<16x128xf32>, vector<16x128xf32> -> vector<16x384xf32>
    %cst_41 = arith.constant dense<0.000000e+00> : vector<16x256xf32>
    %48 = tpu.matmul %47, %3, %cst_41 {dimension_numbers = #tpu.dot_dimension_numbers<[1], [0], [0], [1], [0, 0, 1, 1], [], []>} : vector<16x384xf32>, vector<384x256xf32>, vector<16x256xf32> -> vector<16x256xf32>
    %49 = vector.extract_strided_slice %42 {offsets = [0, 0], sizes = [16, 256], strides = [1, 1]} : vector<16x384xf32> to vector<16x256xf32>
    %50 = arith.addf %48, %49 : vector<16x256xf32>
    %51 = arith.negf %50 : vector<16x256xf32>
    %52 = math.exp %51 : vector<16x256xf32>
    %cst_42 = arith.constant 1.000000e+00 : f32
    %53 = vector.broadcast %cst_42 : f32 to vector<16x256xf32>
    %54 = arith.addf %53, %52 : vector<16x256xf32>
    %55 = arith.divf %53, %54 : vector<16x256xf32>
    %56 = vector.extract_strided_slice %55 {offsets = [0, 0], sizes = [16, 128], strides = [1, 1]} : vector<16x256xf32> to vector<16x128xf32>
    %57 = vector.extract_strided_slice %55 {offsets = [0, 128], sizes = [16, 128], strides = [1, 1]} : vector<16x256xf32> to vector<16x128xf32>
    %58 = arith.mulf %57, %43 : vector<16x128xf32>
    %c8_43 = arith.constant 8 : index
    %c0_44 = arith.constant 0 : index
    %59 = vector.load %arg6[%c8_43, %c0_44] : memref<32x128xf32, #tpu.memory_space<vmem>>, vector<16x128xf32>
    tpu.vector_store %arg6[%c8_43, %c0_44], %58 {strides = array<i32>} : memref<32x128xf32, #tpu.memory_space<vmem>>, vector<16x128xf32>,
    %c7_45 = arith.constant 7 : index
    %c0_46 = arith.constant 0 : index
    %60 = vector.load %arg6[%c7_45, %c0_46] : memref<32x128xf32, #tpu.memory_space<vmem>>, vector<16x128xf32>
    %c8_47 = arith.constant 8 : index
    %c0_48 = arith.constant 0 : index
    %61 = vector.load %arg6[%c8_47, %c0_48] : memref<32x128xf32, #tpu.memory_space<vmem>>, vector<16x128xf32>
    %c9_49 = arith.constant 9 : index
    %c0_50 = arith.constant 0 : index
    %62 = vector.load %arg6[%c9_49, %c0_50] : memref<32x128xf32, #tpu.memory_space<vmem>>, vector<16x128xf32>
    %63 = tpu.concatenate %60, %61, %62 in 1 : vector<16x128xf32>, vector<16x128xf32>, vector<16x128xf32> -> vector<16x384xf32>
    %cst_51 = arith.constant dense<0.000000e+00> : vector<16x128xf32>
    %64 = tpu.matmul %63, %4, %cst_51 {dimension_numbers = #tpu.dot_dimension_numbers<[1], [0], [0], [1], [0, 0, 1, 1], [], []>} : vector<16x384xf32>, vector<384x128xf32>, vector<16x128xf32> -> vector<16x128xf32>
    %65 = vector.extract_strided_slice %42 {offsets = [0, 256], sizes = [16, 128], strides = [1, 1]} : vector<16x384xf32> to vector<16x128xf32>
    %66 = arith.addf %64, %65 : vector<16x128xf32>
    %67 = math.tanh %66 : vector<16x128xf32>
    %cst_52 = arith.constant 1.000000e+00 : f32
    %68 = vector.broadcast %cst_52 : f32 to vector<16x128xf32>
    %69 = arith.subf %68, %56 : vector<16x128xf32>
    %70 = arith.mulf %69, %43 : vector<16x128xf32>
    %71 = arith.mulf %56, %67 : vector<16x128xf32>
    %72 = arith.addf %70, %71 : vector<16x128xf32>
    %c8_53 = arith.constant 8 : index
    %c0_54 = arith.constant 0 : index
    %73 = vector.load %arg6[%c8_53, %c0_54] : memref<32x128xf32, #tpu.memory_space<vmem>>, vector<16x128xf32>
    tpu.vector_store %arg6[%c8_53, %c0_54], %72 {strides = array<i32>} : memref<32x128xf32, #tpu.memory_space<vmem>>, vector<16x128xf32>,
    %c0_55 = arith.constant 0 : index
    %c1_56 = arith.constant 1 : index
    %c0_57 = arith.constant 0 : index
    %c0_58 = arith.constant 0 : index
    %74 = vector.load %arg5[%c0_55, %c1_56, %c0_57, %c0_58] : memref<1x2x16x128xf32, #tpu.memory_space<vmem>>, vector<1x1x16x128xf32>
    %75 = vector.shape_cast %74 : vector<1x1x16x128xf32> to vector<16x128xf32>
    %76 = vector.shape_cast %72 : vector<16x128xf32> to vector<1x1x16x128xf32>
    tpu.vector_store %arg5[%c0_55, %c1_56, %c0_57, %c0_58], %76 {strides = array<i32>} : memref<1x2x16x128xf32, #tpu.memory_space<vmem>>, vector<1x1x16x128xf32>,
    return
  }
  func.func @transform_0(%arg0: i32, %arg1: i32) -> (i32, i32, i32, i32) {
    %c0_i32 = arith.constant 0 : i32
    %c0_i32_0 = arith.constant 0 : i32
    %c0_i32_1 = arith.constant 0 : i32
    return %arg0, %arg1, %c0_i32, %c0_i32_0 : i32, i32, i32, i32
  }
  func.func @transform_1(%arg0: i32, %arg1: i32) -> (i32, i32) {
    %c0_i32 = arith.constant 0 : i32
    %c0_i32_0 = arith.constant 0 : i32
    %c0_i32_1 = arith.constant 0 : i32
    return %c0_i32, %c0_i32_0 : i32, i32
  }
  func.func @transform_2(%arg0: i32, %arg1: i32) -> (i32, i32) {
    %c0_i32 = arith.constant 0 : i32
    %c0_i32_0 = arith.constant 0 : i32
    %c0_i32_1 = arith.constant 0 : i32
    return %c0_i32, %c0_i32_0 : i32, i32
  }
  func.func @transform_3(%arg0: i32, %arg1: i32) -> (i32, i32, i32, i32) {
    %c0_i32 = arith.constant 0 : i32
    %c0_i32_0 = arith.constant 0 : i32
    %c0_i32_1 = arith.constant 0 : i32
    return %arg0, %arg1, %c0_i32, %c0_i32_0 : i32, i32, i32, i32
  }
}

</mosaic_0001>

<llo_original>
// kernel: tpu_custom_call.1
$region0: #{tpu_custom_call.1}
  #allocation0 [shape = 'u32[]', space=smem, size = 0x4, offset = 0x4, fixed_abs, tag = 'smem constant byte address 0x4 - core index']
  #allocation1 [shape = 'u32[72,128]{1,0:T(1,128)}', space=vmem, size = 0x9000, scoped, tag = 'internal scratch']
  #allocation2 [shape = 'f32[32,128]{1,0:T(8,128)}', space=vmem, size = 0x4000, scoped, tag = 'scratch operand']
  %s0 = inlined_call_operand.hbm [shape: f32[2,4,16,384], index: 0, kind: input, shape index: {}]
  %s1 = inlined_call_operand.hbm [shape: f32[384,256], index: 1, kind: input, shape index: {}]
  %s2 = inlined_call_operand.hbm [shape: f32[384,128], index: 2, kind: input, shape index: {}]
  %s3 = inlined_call_operand.hbm [shape: f32[2,4,16,128], index: 3, kind: output, shape index: {}]
  %s4 = sld [smem:[#allocation0]]
  $region61: #{tpu_custom_call.1} parent=0
    _
  %s6 = ssub.s32 1, %s4
  %s7 = scalar_select 0, %s6, %s4
  $region1: #{tpu_custom_call.1} parent=0
    #allocation3 [shape = 'u8[98304]{0}', space=vmem, size = 0x18000, scoped, tag = 'input window, operand 0']
    #allocation4 [shape = 's32[2]{0}', space=sflag, size = 0x8, scoped, tag = 'scoped memory for tpu_custom_call.1']
    #allocation5 [shape = 's32[2]{0}', space=sflag, size = 0x8, scoped, tag = 'scoped memory for tpu_custom_call.1']
    #allocation6 [shape = 'u8[393216]{0}', space=vmem, size = 0x60000, scoped, tag = 'input window, operand 1, single buffered']
    #allocation7 [shape = 's32[1]{0}', space=sflag, size = 0x4, scoped, tag = 'scoped memory for tpu_custom_call.1']
    #allocation8 [shape = 'u8[196608]{0}', space=vmem, size = 0x30000, scoped, tag = 'input window, operand 2, single buffered']
    #allocation9 [shape = 'u8[32768]{0}', space=vmem, size = 0x8000, scoped, tag = 'output window, operand 0']
    %8 = vsyncpa [#allocation4], 0
    %s9 = scalar_lea.sflag [#allocation4], 1
    %10 = vsyncpa %s9, 0
    %11 = vsyncpa [#allocation7], 0
    %12 = vsyncpa [#allocation5], 0
    %s13 = scalar_lea.sflag [#allocation5], 1
    %14 = vsyncpa %s13, 0
    loop: start=0, step=1, limit=6
    $region2: #{tpu_custom_call.1} parent=1 // loop_pre_header
      _
    $region3: #{tpu_custom_call.1} parent=1 // loop_header
      %s16 = sphi 0, %s20
      %p17 = scmp.ge.s32.totalorder %s16, 6
      %s23 = sphi 0, %s35
      %s24 = sphi 0, %s31
      %s25 = sphi 0, %s23
      %s26 = sphi 0, %s24
      %s27 = sphi 0, %s25
      %s28 = sphi 0, %s26
      %s40 = sphi 0, %s42
      %s43 = sphi 0, %s40
      %s44 = sphi 0, %s43
      %s60 = sphi 0, %s44
      %s64 = sphi 0, %s64
      %s66 = sphi 0, %s64
      %s67 = sphi 0, %s66
      %s81 = sphi 0, %s67
      %s85 = sphi 0, %s85
      %s87 = sphi 0, %s85
      %s88 = sphi 0, %s87
      %s102 = sphi 0, %s88
      %s110 = sphi 0, %s112
      %s113 = sphi 0, %s110
      %s114 = sphi 0, %s113
      %s130 = sphi 0, %s114
    $region4: #{tpu_custom_call.1} parent=1 // loop_header_branch
      %19 = sbr.rel (%p17) target = $region8
    $region5: #{tpu_custom_call.1} parent=1 // loop_body
      %s21 = ssub.s32 %s16, 1
      %s22 = ssub.s32 %s16, 2
      %s29 = sadd.s32 1, %s24
      %p30 = scmp.ge.s32.totalorder %s29, 2
      %s31 = scalar_select %p30, 0, %s29
      %s32 = sadd.s32 1, %s23
      %s33 = scalar_select %p30, %s32, %s23
      %p34 = scmp.ge.s32.totalorder %s33, 2
      %s35 = scalar_select %p34, 0, %s33
      %s36 = ssub.s32 %s23, %s35
      %s37 = ssub.s32 %s24, %s31
      %s38 = sor.u32 %s36, %s37
      %p39 = scmp.eq.s32.totalorder %s38, 0
      %s41 = sadd.s32 %s40, 1
      %s42 = scalar_select %p39, %s40, %s41
      %p45 = pneg %p39
      %p46 = scmp.eq.s32.totalorder %s16, 3
      %p47 = por %p45, %p46
      %p48 = scmp.ne.s32.totalorder %s40, %s43
      %p49 = scmp.eq.s32.totalorder %s16, 0
      %p50 = por %p48, %p49
      %p51 = scmp.ne.s32.totalorder %s40, %s43
      %p52 = scmp.eq.s32.totalorder %s21, 3
      %p53 = por %p51, %p52
      %p54 = scmp.ne.s32.totalorder %s43, %s44
      %p55 = scmp.eq.s32.totalorder %s21, 0
      %p56 = por %p54, %p55
      %p57 = scmp.ne.s32.totalorder %s43, %s44
      %p58 = scmp.eq.s32.totalorder %s22, 3
      %p59 = por %p57, %p58
      %p61 = scmp.ne.s32.totalorder %s44, %s60
      %p62 = scmp.eq.s32.totalorder %s22, 0
      %p63 = por %p61, %p62
      %s65 = sadd.s32 %s64, 1
      %p68 = scmp.eq.s32.totalorder %s16, 3
      %p69 = scmp.ne.s32.totalorder %s64, %s66
      %p70 = scmp.eq.s32.totalorder %s16, 0
      %p71 = por %p69, %p70
      %p72 = scmp.ne.s32.totalorder %s64, %s66
      %p73 = scmp.eq.s32.totalorder %s21, 3
      %p74 = por %p72, %p73
      %p75 = scmp.ne.s32.totalorder %s66, %s67
      %p76 = scmp.eq.s32.totalorder %s21, 0
      %p77 = por %p75, %p76
      %p78 = scmp.ne.s32.totalorder %s66, %s67
      %p79 = scmp.eq.s32.totalorder %s22, 3
      %p80 = por %p78, %p79
      %p82 = scmp.ne.s32.totalorder %s67, %s81
      %p83 = scmp.eq.s32.totalorder %s22, 0
      %p84 = por %p82, %p83
      %s86 = sadd.s32 %s85, 1
      %p89 = scmp.eq.s32.totalorder %s16, 3
      %p90 = scmp.ne.s32.totalorder %s85, %s87
      %p91 = scmp.eq.s32.totalorder %s16, 0
      %p92 = por %p90, %p91
      %p93 = scmp.ne.s32.totalorder %s85, %s87
      %p94 = scmp.eq.s32.totalorder %s21, 3
      %p95 = por %p93, %p94
      %p96 = scmp.ne.s32.totalorder %s87, %s88
      %p97 = scmp.eq.s32.totalorder %s21, 0
      %p98 = por %p96, %p97
      %p99 = scmp.ne.s32.totalorder %s87, %s88
      %p100 = scmp.eq.s32.totalorder %s22, 3
      %p101 = por %p99, %p100
      %p103 = scmp.ne.s32.totalorder %s88, %s102
      %p104 = scmp.eq.s32.totalorder %s22, 0
      %p105 = por %p103, %p104
      %s106 = ssub.s32 %s23, %s35
      %s107 = ssub.s32 %s24, %s31
      %s108 = sor.u32 %s106, %s107
      %p109 = scmp.eq.s32.totalorder %s108, 0
      %s111 = sadd.s32 %s110, 1
      %s112 = scalar_select %p109, %s110, %s111
      %p115 = pneg %p109
      %p116 = scmp.eq.s32.totalorder %s16, 3
      %p117 = por %p115, %p116
      %p118 = scmp.ne.s32.totalorder %s110, %s113
      %p119 = scmp.eq.s32.totalorder %s16, 0
      %p120 = por %p118, %p119
      %p121 = scmp.ne.s32.totalorder %s110, %s113
      %p122 = scmp.eq.s32.totalorder %s21, 3
      %p123 = por %p121, %p122
      %p124 = scmp.ne.s32.totalorder %s113, %s114
      %p125 = scmp.eq.s32.totalorder %s21, 0
      %p126 = por %p124, %p125
      %p127 = scmp.ne.s32.totalorder %s113, %s114
      %p128 = scmp.eq.s32.totalorder %s22, 3
      %p129 = por %p127, %p128
      %p131 = scmp.ne.s32.totalorder %s114, %s130
      %p132 = scmp.eq.s32.totalorder %s22, 0
      %p133 = por %p131, %p132
      %p134 = scmp.le.s32.totalorder 1, %s16
      %p135 = scmp.lt.s32.totalorder %s16, 5
      %p136 = pnand %p134, %p135
      %p137 = pneg %p136
      // Predicated region
      $region9: #{tpu_custom_call.1} parent=5 // pred_check
        _
      $region10: #{tpu_custom_call.1} parent=5 // pred_check_branch
        %139 = sbr.rel (%p136) target = $region12
      $region11: #{tpu_custom_call.1} parent=5 // pred_region
        %s140 = ssub.s32 %s16, 1
        // Predicated region
        $region13: #{tpu_custom_call.1} parent=11 // pred_check
          %p141 = pneg %p77
        $region14: #{tpu_custom_call.1} parent=11 // pred_check_branch
          %143 = sbr.rel (%p141) target = $region16
        $region15: #{tpu_custom_call.1} parent=11 // pred_region
          %145 = vsyncadd [#allocation7], 0
          %s146 = sshll.u32 %s1, 4
          %s147 = int_to_ptr.hbm [resolvable:$true] %s146
          %s148 = sshll.u32 [#allocation6], 4
          %s149 = int_to_ptr.vmem [resolvable:$true] %s148
          %154 = dma.hbm_to_vmem [thread:$0]  %s147, 12288, %s149, [#allocation7], 256, 256, 16
        $region16: #{tpu_custom_call.1} parent=11 // pred_fallthru
          _
        // Predicated region
        $region17: #{tpu_custom_call.1} parent=11 // pred_check
          %p155 = pneg %p98
        $region18: #{tpu_custom_call.1} parent=11 // pred_check_branch
          %157 = sbr.rel (%p155) target = $region20
        $region19: #{tpu_custom_call.1} parent=11 // pred_region
          %159 = vsyncadd [#allocation7], 0
          %s160 = sshll.u32 %s2, 4
          %s161 = int_to_ptr.hbm [resolvable:$true] %s160
          %s162 = sshll.u32 [#allocation8], 4
          %s163 = int_to_ptr.vmem [resolvable:$true] %s162
          %168 = dma.hbm_to_vmem [thread:$0]  %s161, 6144, %s163, [#allocation7], 128, 128, 8
        $region20: #{tpu_custom_call.1} parent=11 // pred_fallthru
          _
      $region12: #{tpu_custom_call.1} parent=5 // pred_fallthru
        _
      %p169 = scmp.lt.s32.totalorder %s16, 4
      // Predicated region
      $region21: #{tpu_custom_call.1} parent=5 // pred_check
        %p170 = pneg %p169
      $region22: #{tpu_custom_call.1} parent=5 // pred_check_branch
        %172 = sbr.rel (%p170) target = $region24
      $region23: #{tpu_custom_call.1} parent=5 // pred_region
        // Predicated region
        $region25: #{tpu_custom_call.1} parent=23 // pred_check
          %p173 = pneg %p50
        $region26: #{tpu_custom_call.1} parent=23 // pred_check_branch
          %175 = sbr.rel (%p173) target = $region28
        $region27: #{tpu_custom_call.1} parent=23 // pred_region
          %s176 = sand.u32 %s40, 1
          %s177 = scalar_lea.sflag [#allocation4], %s176
          %s178 = sand.u32 %s40, 1
          %s179 = smul.addr %s178, 96
          %s180 = scalar_lea.vmem [#allocation3], %s179
          %s181 = smul.u32 2, %s24
          %183 = vsyncadd %s177, 0
          %s184 = smul.addr %s181, 6
          %s185 = smul.addr %s23, 24
          %s186 = sadd.s32 %s184, %s185
          %s187 = smul.addr %s186, 8
          %s188 = scalar_lea.hbm %s0, %s187
          %s189 = sshll.u32 %s188, 4
          %s190 = int_to_ptr.hbm [resolvable:$true] %s189
          %s191 = sshll.u32 %s180, 4
          %s192 = int_to_ptr.vmem [resolvable:$true] %s191
          %197 = dma.hbm_to_vmem [thread:$0]  %s190, 1536, %s192, %s177, 384, 384, 24
        $region28: #{tpu_custom_call.1} parent=23 // pred_fallthru
          _
      $region24: #{tpu_custom_call.1} parent=5 // pred_fallthru
        _
      %p198 = scmp.le.s32.totalorder 1, %s16
      %p199 = scmp.lt.s32.totalorder %s16, 5
      %p200 = pnand %p198, %p199
      %p201 = pneg %p200
      // Predicated region
      $region29: #{tpu_custom_call.1} parent=5 // pred_check
        _
      $region30: #{tpu_custom_call.1} parent=5 // pred_check_branch
        %203 = sbr.rel (%p200) target = $region32
      $region31: #{tpu_custom_call.1} parent=5 // pred_region
        %s204 = ssub.s32 %s16, 1
        %s205 = sand.u32 %s43, 1
        %s206 = scalar_lea.sflag [#allocation4], %s205
        %s207 = sand.u32 %s43, 1
        %s208 = smul.addr %s207, 96
        %s209 = scalar_lea.vmem [#allocation3], %s208
        // Predicated region
        $region33: #{tpu_custom_call.1} parent=31 // pred_check
          %p210 = pneg %p56
        $region34: #{tpu_custom_call.1} parent=31 // pred_check_branch
          %212 = sbr.rel (%p210) target = $region36
        $region35: #{tpu_custom_call.1} parent=31 // pred_region
          %214 = dma.done %s206, 1536
        $region36: #{tpu_custom_call.1} parent=31 // pred_fallthru
          _
        // Predicated region
        $region37: #{tpu_custom_call.1} parent=31 // pred_check
          %p215 = pneg %p77
        $region38: #{tpu_custom_call.1} parent=31 // pred_check_branch
          %217 = sbr.rel (%p215) target = $region40
        $region39: #{tpu_custom_call.1} parent=31 // pred_region
          %219 = dma.done [#allocation7], 12288
        $region40: #{tpu_custom_call.1} parent=31 // pred_fallthru
          _
        // Predicated region
        $region41: #{tpu_custom_call.1} parent=31 // pred_check
          %p220 = pneg %p98
        $region42: #{tpu_custom_call.1} parent=31 // pred_check_branch
          %222 = sbr.rel (%p220) target = $region44
        $region43: #{tpu_custom_call.1} parent=31 // pred_region
          %224 = dma.done [#allocation7], 6144
        $region44: #{tpu_custom_call.1} parent=31 // pred_fallthru
          _
        %s225 = sand.u32 %s43, 1
        %s226 = scalar_lea.sflag [#allocation4], %s225
        %s227 = sand.u32 %s43, 1
        %s228 = smul.addr %s227, 96
        %s229 = scalar_lea.vmem [#allocation3], %s228
        %p230 = pneg %p56
        %p231 = pneg %p53
        %p232 = pneg %p77
        %p233 = pneg %p74
        %p234 = pneg %p98
        %p235 = pneg %p95
        %p236 = pneg %p126
        %p237 = pneg %p123
        %s238 = sand.u32 %s113, 1
        %s239 = scalar_lea.sflag [#allocation5], %s238
        %s240 = sand.u32 %s113, 1
        %s241 = smul.addr %s240, 32
        %s242 = scalar_lea.vmem [#allocation9], %s241
        %s243 = smul.u32 2, %s26
        %s244 = smul.u32 2, %s26
        %p245 = scmp.eq.s32.totalorder %s26, 0
        // Predicated region
        $region45: #{tpu_custom_call.1} parent=31 // pred_check
          %p246 = pneg %p245
        $region46: #{tpu_custom_call.1} parent=31 // pred_check_branch
          %248 = sbr.rel (%p246) target = $region48
        $region47: #{tpu_custom_call.1} parent=31 // pred_region
          %249 = vst [vmem:[#allocation2] sm:$0xff] 0.0
          %250 = vst [vmem:[#allocation2 + $0x8] sm:$0xff] 0.0
          %251 = vst [vmem:[#allocation2 + $0x10] sm:$0xff] 0.0
          %252 = vst [vmem:[#allocation2 + $0x18] sm:$0xff] 0.0
        $region48: #{tpu_custom_call.1} parent=31 // pred_fallthru
          _
        %v253 = vld [vmem:[#allocation6] sm:$0xff]
        %v254 = vld [vmem:[#allocation6 + $0x8] sm:$0xff]
        %v255 = vld [vmem:[#allocation6 + $0x10] sm:$0xff]
        %v256 = vld [vmem:[#allocation6 + $0x18] sm:$0xff]
        %v257 = vld [vmem:[#allocation6 + $0x20] sm:$0xff]
        %v258 = vld [vmem:[#allocation6 + $0x28] sm:$0xff]
        %v259 = vld [vmem:[#allocation6 + $0x30] sm:$0xff]
        %v260 = vld [vmem:[#allocation6 + $0x38] sm:$0xff]
        %v261 = vld [vmem:[#allocation6 + $0x40] sm:$0xff]
        %v262 = vld [vmem:[#allocation6 + $0x48] sm:$0xff]
        %v263 = vld [vmem:[#allocation6 + $0x50] sm:$0xff]
        %v264 = vld [vmem:[#allocation6 + $0x58] sm:$0xff]
        %v265 = vld [vmem:[#allocation6 + $0x60] sm:$0xff]
        %v266 = vld [vmem:[#allocation6 + $0x68] sm:$0xff]
        %v267 = vld [vmem:[#allocation6 + $0x70] sm:$0xff]
        %v268 = vld [vmem:[#allocation6 + $0x78] sm:$0xff]
        %v269 = vld [vmem:[#allocation6 + $0x80] sm:$0xff]
        %v270 = vld [vmem:[#allocation6 + $0x88] sm:$0xff]
        %v271 = vld [vmem:[#allocation6 + $0x90] sm:$0xff]
        %v272 = vld [vmem:[#allocation6 + $0x98] sm:$0xff]
        %v273 = vld [vmem:[#allocation6 + $0xa0] sm:$0xff]
        %v274 = vld [vmem:[#allocation6 + $0xa8] sm:$0xff]
        %v275 = vld [vmem:[#allocation6 + $0xb0] sm:$0xff]
        %v276 = vld [vmem:[#allocation6 + $0xb8] sm:$0xff]
        %v277 = vld [vmem:[#allocation6 + $0xc0] sm:$0xff]
        %v278 = vld [vmem:[#allocation6 + $0xc8] sm:$0xff]
        %v279 = vld [vmem:[#allocation6 + $0xd0] sm:$0xff]
        %v280 = vld [vmem:[#allocation6 + $0xd8] sm:$0xff]
        %v281 = vld [vmem:[#allocation6 + $0xe0] sm:$0xff]
        %v282 = vld [vmem:[#allocation6 + $0xe8] sm:$0xff]
        %v283 = vld [vmem:[#allocation6 + $0xf0] sm:$0xff]
        %v284 = vld [vmem:[#allocation6 + $0xf8] sm:$0xff]
        %v285 = vld [vmem:[#allocation6 + $0x100] sm:$0xff]
        %v286 = vld [vmem:[#allocation6 + $0x108] sm:$0xff]
        %v287 = vld [vmem:[#allocation6 + $0x110] sm:$0xff]
        %v288 = vld [vmem:[#allocation6 + $0x118] sm:$0xff]
        %v289 = vld [vmem:[#allocation6 + $0x120] sm:$0xff]
        %v290 = vld [vmem:[#allocation6 + $0x128] sm:$0xff]
        %v291 = vld [vmem:[#allocation6 + $0x130] sm:$0xff]
        %v292 = vld [vmem:[#allocation6 + $0x138] sm:$0xff]
        %v293 = vld [vmem:[#allocation6 + $0x140] sm:$0xff]
        %v294 = vld [vmem:[#allocation6 + $0x148] sm:$0xff]
        %v295 = vld [vmem:[#allocation6 + $0x150] sm:$0xff]
        %v296 = vld [vmem:[#allocation6 + $0x158] sm:$0xff]
        %v297 = vld [vmem:[#allocation6 + $0x160] sm:$0xff]
        %v298 = vld [vmem:[#allocation6 + $0x168] sm:$0xff]
        %v299 = vld [vmem:[#allocation6 + $0x170] sm:$0xff]
        %v300 = vld [vmem:[#allocation6 + $0x178] sm:$0xff]
        %v301 = vld [vmem:[#allocation6 + $0x180] sm:$0xff]
        %v302 = vld [vmem:[#allocation6 + $0x188] sm:$0xff]
        %v303 = vld [vmem:[#allocation6 + $0x190] sm:$0xff]
        %v304 = vld [vmem:[#allocation6 + $0x198] sm:$0xff]
        %v305 = vld [vmem:[#allocation6 + $0x1a0] sm:$0xff]
        %v306 = vld [vmem:[#allocation6 + $0x1a8] sm:$0xff]
        %v307 = vld [vmem:[#allocation6 + $0x1b0] sm:$0xff]
        %v308 = vld [vmem:[#allocation6 + $0x1b8] sm:$0xff]
        %v309 = vld [vmem:[#allocation6 + $0x1c0] sm:$0xff]
        %v310 = vld [vmem:[#allocation6 + $0x1c8] sm:$0xff]
        %v311 = vld [vmem:[#allocation6 + $0x1d0] sm:$0xff]
        %v312 = vld [vmem:[#allocation6 + $0x1d8] sm:$0xff]
        %v313 = vld [vmem:[#allocation6 + $0x1e0] sm:$0xff]
        %v314 = vld [vmem:[#allocation6 + $0x1e8] sm:$0xff]
        %v315 = vld [vmem:[#allocation6 + $0x1f0] sm:$0xff]
        %v316 = vld [vmem:[#allocation6 + $0x1f8] sm:$0xff]
        %v317 = vld [vmem:[#allocation6 + $0x200] sm:$0xff]
        %v318 = vld [vmem:[#allocation6 + $0x208] sm:$0xff]
        %v319 = vld [vmem:[#allocation6 + $0x210] sm:$0xff]
        %v320 = vld [vmem:[#allocation6 + $0x218] sm:$0xff]
        %v321 = vld [vmem:[#allocation6 + $0x220] sm:$0xff]
        %v322 = vld [vmem:[#allocation6 + $0x228] sm:$0xff]
        %v323 = vld [vmem:[#allocation6 + $0x230] sm:$0xff]
        %v324 = vld [vmem:[#allocation6 + $0x238] sm:$0xff]
        %v325 = vld [vmem:[#allocation6 + $0x240] sm:$0xff]
        %v326 = vld [vmem:[#allocation6 + $0x248] sm:$0xff]
        %v327 = vld [vmem:[#allocation6 + $0x250] sm:$0xff]
        %v328 = vld [vmem:[#allocation6 + $0x258] sm:$0xff]
        %v329 = vld [vmem:[#allocation6 + $0x260] sm:$0xff]
        %v330 = vld [vmem:[#allocation6 + $0x268] sm:$0xff]
        %v331 = vld [vmem:[#allocation6 + $0x270] sm:$0xff]
        %v332 = vld [vmem:[#allocation6 + $0x278] sm:$0xff]
        %v333 = vld [vmem:[#allocation6 + $0x280] sm:$0xff]
        %v334 = vld [vmem:[#allocation6 + $0x288] sm:$0xff]
        %v335 = vld [vmem:[#allocation6 + $0x290] sm:$0xff]
        %v336 = vld [vmem:[#allocation6 + $0x298] sm:$0xff]
        %v337 = vld [vmem:[#allocation6 + $0x2a0] sm:$0xff]
        %v338 = vld [vmem:[#allocation6 + $0x2a8] sm:$0xff]
        %v339 = vld [vmem:[#allocation6 + $0x2b0] sm:$0xff]
        %v340 = vld [vmem:[#allocation6 + $0x2b8] sm:$0xff]
        %v341 = vld [vmem:[#allocation6 + $0x2c0] sm:$0xff]
        %v342 = vld [vmem:[#allocation6 + $0x2c8] sm:$0xff]
        %v343 = vld [vmem:[#allocation6 + $0x2d0] sm:$0xff]
        %v344 = vld [vmem:[#allocation6 + $0x2d8] sm:$0xff]
        %v345 = vld [vmem:[#allocation6 + $0x2e0] sm:$0xff]
        %v346 = vld [vmem:[#allocation6 + $0x2e8] sm:$0xff]
        %v347 = vld [vmem:[#allocation6 + $0x2f0] sm:$0xff]
        %v348 = vld [vmem:[#allocation6 + $0x2f8] sm:$0xff]
        %v349 = vld [vmem:[#allocation8] sm:$0xff]
        %v350 = vld [vmem:[#allocation8 + $0x8] sm:$0xff]
        %v351 = vld [vmem:[#allocation8 + $0x10] sm:$0xff]
        %v352 = vld [vmem:[#allocation8 + $0x18] sm:$0xff]
        %v353 = vld [vmem:[#allocation8 + $0x20] sm:$0xff]
        %v354 = vld [vmem:[#allocation8 + $0x28] sm:$0xff]
        %v355 = vld [vmem:[#allocation8 + $0x30] sm:$0xff]
        %v356 = vld [vmem:[#allocation8 + $0x38] sm:$0xff]
        %v357 = vld [vmem:[#allocation8 + $0x40] sm:$0xff]
        %v358 = vld [vmem:[#allocation8 + $0x48] sm:$0xff]
        %v359 = vld [vmem:[#allocation8 + $0x50] sm:$0xff]
        %v360 = vld [vmem:[#allocation8 + $0x58] sm:$0xff]
        %v361 = vld [vmem:[#allocation8 + $0x60] sm:$0xff]
        %v362 = vld [vmem:[#allocation8 + $0x68] sm:$0xff]
        %v363 = vld [vmem:[#allocation8 + $0x70] sm:$0xff]
        %v364 = vld [vmem:[#allocation8 + $0x78] sm:$0xff]
        %v365 = vld [vmem:[#allocation8 + $0x80] sm:$0xff]
        %v366 = vld [vmem:[#allocation8 + $0x88] sm:$0xff]
        %v367 = vld [vmem:[#allocation8 + $0x90] sm:$0xff]
        %v368 = vld [vmem:[#allocation8 + $0x98] sm:$0xff]
        %v369 = vld [vmem:[#allocation8 + $0xa0] sm:$0xff]
        %v370 = vld [vmem:[#allocation8 + $0xa8] sm:$0xff]
        %v371 = vld [vmem:[#allocation8 + $0xb0] sm:$0xff]
        %v372 = vld [vmem:[#allocation8 + $0xb8] sm:$0xff]
        %v373 = vld [vmem:[#allocation8 + $0xc0] sm:$0xff]
        %v374 = vld [vmem:[#allocation8 + $0xc8] sm:$0xff]
        %v375 = vld [vmem:[#allocation8 + $0xd0] sm:$0xff]
        %v376 = vld [vmem:[#allocation8 + $0xd8] sm:$0xff]
        %v377 = vld [vmem:[#allocation8 + $0xe0] sm:$0xff]
        %v378 = vld [vmem:[#allocation8 + $0xe8] sm:$0xff]
        %v379 = vld [vmem:[#allocation8 + $0xf0] sm:$0xff]
        %v380 = vld [vmem:[#allocation8 + $0xf8] sm:$0xff]
        %v381 = vld [vmem:[#allocation8 + $0x100] sm:$0xff]
        %v382 = vld [vmem:[#allocation8 + $0x108] sm:$0xff]
        %v383 = vld [vmem:[#allocation8 + $0x110] sm:$0xff]
        %v384 = vld [vmem:[#allocation8 + $0x118] sm:$0xff]
        %v385 = vld [vmem:[#allocation8 + $0x120] sm:$0xff]
        %v386 = vld [vmem:[#allocation8 + $0x128] sm:$0xff]
        %v387 = vld [vmem:[#allocation8 + $0x130] sm:$0xff]
        %v388 = vld [vmem:[#allocation8 + $0x138] sm:$0xff]
        %v389 = vld [vmem:[#allocation8 + $0x140] sm:$0xff]
        %v390 = vld [vmem:[#allocation8 + $0x148] sm:$0xff]
        %v391 = vld [vmem:[#allocation8 + $0x150] sm:$0xff]
        %v392 = vld [vmem:[#allocation8 + $0x158] sm:$0xff]
        %v393 = vld [vmem:[#allocation8 + $0x160] sm:$0xff]
        %v394 = vld [vmem:[#allocation8 + $0x168] sm:$0xff]
        %v395 = vld [vmem:[#allocation8 + $0x170] sm:$0xff]
        %v396 = vld [vmem:[#allocation8 + $0x178] sm:$0xff]
        %v397 = vld [vmem:[%s209] sm:$0xff]
        %v398 = vld [vmem:[%s209 + $0x8] sm:$0xff]
        %v399 = vld [vmem:[%s209 + $0x10] sm:$0xff]
        %v400 = vld [vmem:[%s209 + $0x18] sm:$0xff]
        %v401 = vld [vmem:[%s209 + $0x20] sm:$0xff]
        %v402 = vld [vmem:[%s209 + $0x28] sm:$0xff]
        %v403 = vld [vmem:[#allocation2 + $0x8] sm:$0xff]
        %v404 = vld [vmem:[#allocation2 + $0x10] sm:$0xff]
        %v405 = vld [vmem:[#allocation2 + $0x7] sm:$0xff]
        %v406 = vld [vmem:[#allocation2 + $0xf] sm:$0xff]
        %v407 = vld [vmem:[#allocation2 + $0x9] sm:$0xff]
        %v408 = vld [vmem:[#allocation2 + $0x11] sm:$0xff]
        %409 = vmatpush.msra.mxu0 %v283
        %410 = vmatpush.msra.mxu0 %v281
        %411 = vmatpush.msra.mxu0 %v279
        %412 = vmatpush.msra.mxu0 %v277
        %413 = vmatpush.msra.mxu0 %v275
        %414 = vmatpush.msra.mxu0 %v273
        %415 = vmatpush.msra.mxu0 %v271
        %416 = vmatpush.msra.mxu0 %v269
        %417 = vmatpush.msra.mxu0 %v267
        %418 = vmatpush.msra.mxu0 %v265
        %419 = vmatpush.msra.mxu0 %v263
        %420 = vmatpush.msra.mxu0 %v261
        %421 = vmatpush.msra.mxu0 %v259
        %422 = vmatpush.msra.mxu0 %v257
        %423 = vmatpush.msra.mxu0 %v255
        %424 = vmatpush.msra.mxu0 %v253
        %425 = vmatmul.f32.gmra.mxu0 %v405
        %v426 = vpop.f32.mrf.mxu0
        %v427 = vadd.f32 %v397, %v426
        %428 = vmatmul.f32.gmra.mxu0 %v406
        %v429 = vpop.f32.mrf.mxu0
        %v430 = vadd.f32 %v400, %v429
        %431 = vdwg.mxu0
        %432 = vmatpush.msra.mxu0 %v315
        %433 = vmatpush.msra.mxu0 %v313
        %434 = vmatpush.msra.mxu0 %v311
        %435 = vmatpush.msra.mxu0 %v309
        %436 = vmatpush.msra.mxu0 %v307
        %437 = vmatpush.msra.mxu0 %v305
        %438 = vmatpush.msra.mxu0 %v303
        %439 = vmatpush.msra.mxu0 %v301
        %440 = vmatpush.msra.mxu0 %v299
        %441 = vmatpush.msra.mxu0 %v297
        %442 = vmatpush.msra.mxu0 %v295
        %443 = vmatpush.msra.mxu0 %v293
        %444 = vmatpush.msra.mxu0 %v291
        %445 = vmatpush.msra.mxu0 %v289
        %446 = vmatpush.msra.mxu0 %v287
        %447 = vmatpush.msra.mxu0 %v285
        %448 = vmatmul.f32.gmra.mxu0 %v403
        %v449 = vpop.f32.mrf.mxu0
        %v450 = vadd.f32 %v427, %v449
        %451 = vmatmul.f32.gmra.mxu0 %v404
        %v452 = vpop.f32.mrf.mxu0
        %v453 = vadd.f32 %v430, %v452
        %454 = vdwg.mxu0
        %455 = vmatpush.msra.mxu0 %v347
        %456 = vmatpush.msra.mxu0 %v345
        %457 = vmatpush.msra.mxu0 %v343
        %458 = vmatpush.msra.mxu0 %v341
        %459 = vmatpush.msra.mxu0 %v339
        %460 = vmatpush.msra.mxu0 %v337
        %461 = vmatpush.msra.mxu0 %v335
        %462 = vmatpush.msra.mxu0 %v333
        %463 = vmatpush.msra.mxu0 %v331
        %464 = vmatpush.msra.mxu0 %v329
        %465 = vmatpush.msra.mxu0 %v327
        %466 = vmatpush.msra.mxu0 %v325
        %467 = vmatpush.msra.mxu0 %v323
        %468 = vmatpush.msra.mxu0 %v321
        %469 = vmatpush.msra.mxu0 %v319
        %470 = vmatpush.msra.mxu0 %v317
        %471 = vmatmul.f32.gmra.mxu0 %v407
        %v472 = vpop.f32.mrf.mxu0
        %v473 = vadd.f32 %v450, %v472
        %474 = vmatmul.f32.gmra.mxu0 %v408
        %v475 = vpop.f32.mrf.mxu0
        %v476 = vadd.f32 %v453, %v475
        %477 = vdwg.mxu0
        %478 = vmatpush.msra.mxu0 %v284
        %479 = vmatpush.msra.mxu0 %v282
        %480 = vmatpush.msra.mxu0 %v280
        %481 = vmatpush.msra.mxu0 %v278
        %482 = vmatpush.msra.mxu0 %v276
        %483 = vmatpush.msra.mxu0 %v274
        %484 = vmatpush.msra.mxu0 %v272
        %485 = vmatpush.msra.mxu0 %v270
        %486 = vmatpush.msra.mxu0 %v268
        %487 = vmatpush.msra.mxu0 %v266
        %488 = vmatpush.msra.mxu0 %v264
        %489 = vmatpush.msra.mxu0 %v262
        %490 = vmatpush.msra.mxu0 %v260
        %491 = vmatpush.msra.mxu0 %v258
        %492 = vmatpush.msra.mxu0 %v256
        %493 = vmatpush.msra.mxu0 %v254
        %494 = vmatmul.f32.gmra.mxu0 %v405
        %v495 = vpop.f32.mrf.mxu0
        %v496 = vadd.f32 %v398, %v495
        %497 = vmatmul.f32.gmra.mxu0 %v406
        %v498 = vpop.f32.mrf.mxu0
        %v499 = vadd.f32 %v401, %v498
        %500 = vdwg.mxu0
        %501 = vmatpush.msra.mxu0 %v316
        %502 = vmatpush.msra.mxu0 %v314
        %503 = vmatpush.msra.mxu0 %v312
        %504 = vmatpush.msra.mxu0 %v310
        %505 = vmatpush.msra.mxu0 %v308
        %506 = vmatpush.msra.mxu0 %v306
        %507 = vmatpush.msra.mxu0 %v304
        %508 = vmatpush.msra.mxu0 %v302
        %509 = vmatpush.msra.mxu0 %v300
        %510 = vmatpush.msra.mxu0 %v298
        %511 = vmatpush.msra.mxu0 %v296
        %512 = vmatpush.msra.mxu0 %v294
        %513 = vmatpush.msra.mxu0 %v292
        %514 = vmatpush.msra.mxu0 %v290
        %515 = vmatpush.msra.mxu0 %v288
        %516 = vmatpush.msra.mxu0 %v286
        %517 = vmatmul.f32.gmra.mxu0 %v403
        %v518 = vpop.f32.mrf.mxu0
        %v519 = vadd.f32 %v496, %v518
        %520 = vmatmul.f32.gmra.mxu0 %v404
        %v521 = vpop.f32.mrf.mxu0
        %v522 = vadd.f32 %v499, %v521
        %523 = vdwg.mxu0
        %524 = vmatpush.msra.mxu0 %v348
        %525 = vmatpush.msra.mxu0 %v346
        %526 = vmatpush.msra.mxu0 %v344
        %527 = vmatpush.msra.mxu0 %v342
        %528 = vmatpush.msra.mxu0 %v340
        %529 = vmatpush.msra.mxu0 %v338
        %530 = vmatpush.msra.mxu0 %v336
        %531 = vmatpush.msra.mxu0 %v334
        %532 = vmatpush.msra.mxu0 %v332
        %533 = vmatpush.msra.mxu0 %v330
        %534 = vmatpush.msra.mxu0 %v328
        %535 = vmatpush.msra.mxu0 %v326
        %536 = vmatpush.msra.mxu0 %v324
        %537 = vmatpush.msra.mxu0 %v322
        %538 = vmatpush.msra.mxu0 %v320
        %539 = vmatpush.msra.mxu0 %v318
        %540 = vmatmul.f32.gmra.mxu0 %v407
        %v541 = vpop.f32.mrf.mxu0
        %v542 = vadd.f32 %v519, %v541
        %543 = vmatmul.f32.gmra.mxu0 %v408
        %v544 = vpop.f32.mrf.mxu0
        %v545 = vadd.f32 %v522, %v544
        %546 = vdwg.mxu0
        %v547 = vxor.u32 %v473, 2147483648
        %v548 = vxor.u32 %v542, 2147483648
        %v549 = vxor.u32 %v476, 2147483648
        %v550 = vxor.u32 %v545, 2147483648
        %v551 = vmul.f32 %v547, 1.442695
        %v552 = vpow.pop %v551
        %v553 = vmul.f32 %v548, 1.442695
        %v554 = vpow.pop %v553
        %v555 = vmul.f32 %v549, 1.442695
        %v556 = vpow.pop %v555
        %v557 = vmul.f32 %v550, 1.442695
        %v558 = vpow.pop %v557
        %v559 = vadd.f32 %v552, 1.0
        %v560 = vadd.f32 %v554, 1.0
        %v561 = vadd.f32 %v556, 1.0
        %v562 = vadd.f32 %v558, 1.0
        %v563 = vrcp.pop %v559
        %v564 = vmul.f32 %v559, %v563
        %v565 = vsub.f32 1.0, %v564
        %v566 = vmul.f32 %v563, %v565
        %v567 = vadd.f32 %v563, %v566
        %vm568 = vweird.f32 %v559
        %vm569 = vweird.f32 %v563
        %vm570 = vmor %vm568, %vm569
        %v571 = vsel %vm570, %v563, %v567
        %v572 = vand.u32 2147483647, %v559
        %vm573 = vcmp.eq.f32.partialorder %v572, 8.507059e+37
        %v574 = vand.u32 %v559, 2147483648
        %v575 = vor.u32 1.1754944e-38, %v574
        %v576 = vsel %vm573, %v575, %v571
        %v577 = vmul.f32 1.0, %v576
        %v578 = vrcp.pop %v560
        %v579 = vmul.f32 %v560, %v578
        %v580 = vsub.f32 1.0, %v579
        %v581 = vmul.f32 %v578, %v580
        %v582 = vadd.f32 %v578, %v581
        %vm583 = vweird.f32 %v560
        %vm584 = vweird.f32 %v578
        %vm585 = vmor %vm583, %vm584
        %v586 = vsel %vm585, %v578, %v582
        %v587 = vand.u32 2147483647, %v560
        %vm588 = vcmp.eq.f32.partialorder %v587, 8.507059e+37
        %v589 = vand.u32 %v560, 2147483648
        %v590 = vor.u32 1.1754944e-38, %v589
        %v591 = vsel %vm588, %v590, %v586
        %v592 = vmul.f32 1.0, %v591
        %v593 = vrcp.pop %v561
        %v594 = vmul.f32 %v561, %v593
        %v595 = vsub.f32 1.0, %v594
        %v596 = vmul.f32 %v593, %v595
        %v597 = vadd.f32 %v593, %v596
        %vm598 = vweird.f32 %v561
        %vm599 = vweird.f32 %v593
        %vm600 = vmor %vm598, %vm599
        %v601 = vsel %vm600, %v593, %v597
        %v602 = vand.u32 2147483647, %v561
        %vm603 = vcmp.eq.f32.partialorder %v602, 8.507059e+37
        %v604 = vand.u32 %v561, 2147483648
        %v605 = vor.u32 1.1754944e-38, %v604
        %v606 = vsel %vm603, %v605, %v601
        %v607 = vmul.f32 1.0, %v606
        %v608 = vrcp.pop %v562
        %v609 = vmul.f32 %v562, %v608
        %v610 = vsub.f32 1.0, %v609
        %v611 = vmul.f32 %v608, %v610
        %v612 = vadd.f32 %v608, %v611
        %vm613 = vweird.f32 %v562
        %vm614 = vweird.f32 %v608
        %vm615 = vmor %vm613, %vm614
        %v616 = vsel %vm615, %v608, %v612
        %v617 = vand.u32 2147483647, %v562
        %vm618 = vcmp.eq.f32.partialorder %v617, 8.507059e+37
        %v619 = vand.u32 %v562, 2147483648
        %v620 = vor.u32 1.1754944e-38, %v619
        %v621 = vsel %vm618, %v620, %v616
        %v622 = vmul.f32 1.0, %v621
        %v623 = vmul.f32 %v592, %v403
        %v624 = vmul.f32 %v622, %v404
        %625 = vst [vmem:[#allocation2 + $0x8] sm:$0xff] %v623
        %626 = vst [vmem:[#allocation2 + $0x10] sm:$0xff] %v624
        %v627 = vld [vmem:[#allocation2 + $0x7] sm:$0xff]
        %v628 = vld [vmem:[#allocation2 + $0xf] sm:$0xff]
        %v629 = vld [vmem:[#allocation2 + $0x8] sm:$0xff]
        %v630 = vld [vmem:[#allocation2 + $0x10] sm:$0xff]
        %v631 = vld [vmem:[#allocation2 + $0x9] sm:$0xff]
        %v632 = vld [vmem:[#allocation2 + $0x11] sm:$0xff]
        %633 = vmatpush.msra.mxu0 %v364
        %634 = vmatpush.msra.mxu0 %v363
        %635 = vmatpush.msra.mxu0 %v362
        %636 = vmatpush.msra.mxu0 %v361
        %637 = vmatpush.msra.mxu0 %v360
        %638 = vmatpush.msra.mxu0 %v359
        %639 = vmatpush.msra.mxu0 %v358
        %640 = vmatpush.msra.mxu0 %v357
        %641 = vmatpush.msra.mxu0 %v356
        %642 = vmatpush.msra.mxu0 %v355
        %643 = vmatpush.msra.mxu0 %v354
        %644 = vmatpush.msra.mxu0 %v353
        %645 = vmatpush.msra.mxu0 %v352
        %646 = vmatpush.msra.mxu0 %v351
        %647 = vmatpush.msra.mxu0 %v350
        %648 = vmatpush.msra.mxu0 %v349
        %649 = vmatmul.f32.gmra.mxu0 %v627
        %v650 = vpop.f32.mrf.mxu0
        %v651 = vadd.f32 %v399, %v650
        %652 = vmatmul.f32.gmra.mxu0 %v628
        %v653 = vpop.f32.mrf.mxu0
        %v654 = vadd.f32 %v402, %v653
        %655 = vdwg.mxu0
        %656 = vmatpush.msra.mxu0 %v380
        %657 = vmatpush.msra.mxu0 %v379
        %658 = vmatpush.msra.mxu0 %v378
        %659 = vmatpush.msra.mxu0 %v377
        %660 = vmatpush.msra.mxu0 %v376
        %661 = vmatpush.msra.mxu0 %v375
        %662 = vmatpush.msra.mxu0 %v374
        %663 = vmatpush.msra.mxu0 %v373
        %664 = vmatpush.msra.mxu0 %v372
        %665 = vmatpush.msra.mxu0 %v371
        %666 = vmatpush.msra.mxu0 %v370
        %667 = vmatpush.msra.mxu0 %v369
        %668 = vmatpush.msra.mxu0 %v368
        %669 = vmatpush.msra.mxu0 %v367
        %670 = vmatpush.msra.mxu0 %v366
        %671 = vmatpush.msra.mxu0 %v365
        %672 = vmatmul.f32.gmra.mxu0 %v629
        %v673 = vpop.f32.mrf.mxu0
        %v674 = vadd.f32 %v651, %v673
        %675 = vmatmul.f32.gmra.mxu0 %v630
        %v676 = vpop.f32.mrf.mxu0
        %v677 = vadd.f32 %v654, %v676
        %678 = vdwg.mxu0
        %679 = vmatpush.msra.mxu0 %v396
        %680 = vmatpush.msra.mxu0 %v395
        %681 = vmatpush.msra.mxu0 %v394
        %682 = vmatpush.msra.mxu0 %v393
        %683 = vmatpush.msra.mxu0 %v392
        %684 = vmatpush.msra.mxu0 %v391
        %685 = vmatpush.msra.mxu0 %v390
        %686 = vmatpush.msra.mxu0 %v389
        %687 = vmatpush.msra.mxu0 %v388
        %688 = vmatpush.msra.mxu0 %v387
        %689 = vmatpush.msra.mxu0 %v386
        %690 = vmatpush.msra.mxu0 %v385
        %691 = vmatpush.msra.mxu0 %v384
        %692 = vmatpush.msra.mxu0 %v383
        %693 = vmatpush.msra.mxu0 %v382
        %694 = vmatpush.msra.mxu0 %v381
        %695 = vmatmul.f32.gmra.mxu0 %v631
        %v696 = vpop.f32.mrf.mxu0
        %v697 = vadd.f32 %v674, %v696
        %698 = vmatmul.f32.gmra.mxu0 %v632
        %v699 = vpop.f32.mrf.mxu0
        %v700 = vadd.f32 %v677, %v699
        %701 = vdwg.mxu0
        %v702 = vtanh.pop %v697
        %v703 = vtanh.pop %v700
        %v704 = vsub.f32 1.0, %v577
        %v705 = vsub.f32 1.0, %v607
        %v706 = vmul.f32 %v704, %v403
        %v707 = vmul.f32 %v705, %v404
        %v708 = vmul.f32 %v577, %v702
        %v709 = vmul.f32 %v607, %v703
        %v710 = vadd.f32 %v706, %v708
        %v711 = vadd.f32 %v707, %v709
        %712 = vst [vmem:[#allocation2 + $0x8] sm:$0xff] %v710
        %713 = vst [vmem:[#allocation2 + $0x10] sm:$0xff] %v711
        %714 = vst [vmem:[%s242] sm:$0xff] %v710
        %715 = vst [vmem:[%s242 + $0x8] sm:$0xff] %v711
        %s716 = scalar_lea.vmem %s209, 48 [#allocation3]
        %v717 = vld [vmem:[%s716] sm:$0xff]
        %v718 = vld [vmem:[%s716 + $0x8] sm:$0xff]
        %v719 = vld [vmem:[%s716 + $0x10] sm:$0xff]
        %v720 = vld [vmem:[%s716 + $0x18] sm:$0xff]
        %v721 = vld [vmem:[%s716 + $0x20] sm:$0xff]
        %v722 = vld [vmem:[%s716 + $0x28] sm:$0xff]
        %v723 = vld [vmem:[#allocation2 + $0x8] sm:$0xff]
        %v724 = vld [vmem:[#allocation2 + $0x10] sm:$0xff]
        %v725 = vld [vmem:[#allocation2 + $0x7] sm:$0xff]
        %v726 = vld [vmem:[#allocation2 + $0xf] sm:$0xff]
        %v727 = vld [vmem:[#allocation2 + $0x9] sm:$0xff]
        %v728 = vld [vmem:[#allocation2 + $0x11] sm:$0xff]
        %729 = vmatpush.msra.mxu0 %v283
        %730 = vmatpush.msra.mxu0 %v281
        %731 = vmatpush.msra.mxu0 %v279
        %732 = vmatpush.msra.mxu0 %v277
        %733 = vmatpush.msra.mxu0 %v275
        %734 = vmatpush.msra.mxu0 %v273
        %735 = vmatpush.msra.mxu0 %v271
        %736 = vmatpush.msra.mxu0 %v269
        %737 = vmatpush.msra.mxu0 %v267
        %738 = vmatpush.msra.mxu0 %v265
        %739 = vmatpush.msra.mxu0 %v263
        %740 = vmatpush.msra.mxu0 %v261
        %741 = vmatpush.msra.mxu0 %v259
        %742 = vmatpush.msra.mxu0 %v257
        %743 = vmatpush.msra.mxu0 %v255
        %744 = vmatpush.msra.mxu0 %v253
        %745 = vmatmul.f32.gmra.mxu0 %v725
        %v746 = vpop.f32.mrf.mxu0
        %v747 = vadd.f32 %v717, %v746
        %748 = vmatmul.f32.gmra.mxu0 %v726
        %v749 = vpop.f32.mrf.mxu0
        %v750 = vadd.f32 %v720, %v749
        %751 = vdwg.mxu0
        %752 = vmatpush.msra.mxu0 %v315
        %753 = vmatpush.msra.mxu0 %v313
        %754 = vmatpush.msra.mxu0 %v311
        %755 = vmatpush.msra.mxu0 %v309
        %756 = vmatpush.msra.mxu0 %v307
        %757 = vmatpush.msra.mxu0 %v305
        %758 = vmatpush.msra.mxu0 %v303
        %759 = vmatpush.msra.mxu0 %v301
        %760 = vmatpush.msra.mxu0 %v299
        %761 = vmatpush.msra.mxu0 %v297
        %762 = vmatpush.msra.mxu0 %v295
        %763 = vmatpush.msra.mxu0 %v293
        %764 = vmatpush.msra.mxu0 %v291
        %765 = vmatpush.msra.mxu0 %v289
        %766 = vmatpush.msra.mxu0 %v287
        %767 = vmatpush.msra.mxu0 %v285
        %768 = vmatmul.f32.gmra.mxu0 %v723
        %v769 = vpop.f32.mrf.mxu0
        %v770 = vadd.f32 %v747, %v769
        %771 = vmatmul.f32.gmra.mxu0 %v724
        %v772 = vpop.f32.mrf.mxu0
        %v773 = vadd.f32 %v750, %v772
        %774 = vdwg.mxu0
        %775 = vmatpush.msra.mxu0 %v347
        %776 = vmatpush.msra.mxu0 %v345
        %777 = vmatpush.msra.mxu0 %v343
        %778 = vmatpush.msra.mxu0 %v341
        %779 = vmatpush.msra.mxu0 %v339
        %780 = vmatpush.msra.mxu0 %v337
        %781 = vmatpush.msra.mxu0 %v335
        %782 = vmatpush.msra.mxu0 %v333
        %783 = vmatpush.msra.mxu0 %v331
        %784 = vmatpush.msra.mxu0 %v329
        %785 = vmatpush.msra.mxu0 %v327
        %786 = vmatpush.msra.mxu0 %v325
        %787 = vmatpush.msra.mxu0 %v323
        %788 = vmatpush.msra.mxu0 %v321
        %789 = vmatpush.msra.mxu0 %v319
        %790 = vmatpush.msra.mxu0 %v317
        %791 = vmatmul.f32.gmra.mxu0 %v727
        %v792 = vpop.f32.mrf.mxu0
        %v793 = vadd.f32 %v770, %v792
        %794 = vmatmul.f32.gmra.mxu0 %v728
        %v795 = vpop.f32.mrf.mxu0
        %v796 = vadd.f32 %v773, %v795
        %797 = vdwg.mxu0
        %798 = vmatpush.msra.mxu0 %v284
        %799 = vmatpush.msra.mxu0 %v282
        %800 = vmatpush.msra.mxu0 %v280
        %801 = vmatpush.msra.mxu0 %v278
        %802 = vmatpush.msra.mxu0 %v276
        %803 = vmatpush.msra.mxu0 %v274
        %804 = vmatpush.msra.mxu0 %v272
        %805 = vmatpush.msra.mxu0 %v270
        %806 = vmatpush.msra.mxu0 %v268
        %807 = vmatpush.msra.mxu0 %v266
        %808 = vmatpush.msra.mxu0 %v264
        %809 = vmatpush.msra.mxu0 %v262
        %810 = vmatpush.msra.mxu0 %v260
        %811 = vmatpush.msra.mxu0 %v258
        %812 = vmatpush.msra.mxu0 %v256
        %813 = vmatpush.msra.mxu0 %v254
        %814 = vmatmul.f32.gmra.mxu0 %v725
        %v815 = vpop.f32.mrf.mxu0
        %v816 = vadd.f32 %v718, %v815
        %817 = vmatmul.f32.gmra.mxu0 %v726
        %v818 = vpop.f32.mrf.mxu0
        %v819 = vadd.f32 %v721, %v818
        %820 = vdwg.mxu0
        %821 = vmatpush.msra.mxu0 %v316
        %822 = vmatpush.msra.mxu0 %v314
        %823 = vmatpush.msra.mxu0 %v312
        %824 = vmatpush.msra.mxu0 %v310
        %825 = vmatpush.msra.mxu0 %v308
        %826 = vmatpush.msra.mxu0 %v306
        %827 = vmatpush.msra.mxu0 %v304
        %828 = vmatpush.msra.mxu0 %v302
        %829 = vmatpush.msra.mxu0 %v300
        %830 = vmatpush.msra.mxu0 %v298
        %831 = vmatpush.msra.mxu0 %v296
        %832 = vmatpush.msra.mxu0 %v294
        %833 = vmatpush.msra.mxu0 %v292
        %834 = vmatpush.msra.mxu0 %v290
        %835 = vmatpush.msra.mxu0 %v288
        %836 = vmatpush.msra.mxu0 %v286
        %837 = vmatmul.f32.gmra.mxu0 %v723
        %v838 = vpop.f32.mrf.mxu0
        %v839 = vadd.f32 %v816, %v838
        %840 = vmatmul.f32.gmra.mxu0 %v724
        %v841 = vpop.f32.mrf.mxu0
        %v842 = vadd.f32 %v819, %v841
        %843 = vdwg.mxu0
        %844 = vmatpush.msra.mxu0 %v348
        %845 = vmatpush.msra.mxu0 %v346
        %846 = vmatpush.msra.mxu0 %v344
        %847 = vmatpush.msra.mxu0 %v342
        %848 = vmatpush.msra.mxu0 %v340
        %849 = vmatpush.msra.mxu0 %v338
        %850 = vmatpush.msra.mxu0 %v336
        %851 = vmatpush.msra.mxu0 %v334
        %852 = vmatpush.msra.mxu0 %v332
        %853 = vmatpush.msra.mxu0 %v330
        %854 = vmatpush.msra.mxu0 %v328
        %855 = vmatpush.msra.mxu0 %v326
        %856 = vmatpush.msra.mxu0 %v324
        %857 = vmatpush.msra.mxu0 %v322
        %858 = vmatpush.msra.mxu0 %v320
        %859 = vmatpush.msra.mxu0 %v318
        %860 = vmatmul.f32.gmra.mxu0 %v727
        %v861 = vpop.f32.mrf.mxu0
        %v862 = vadd.f32 %v839, %v861
        %863 = vmatmul.f32.gmra.mxu0 %v728
        %v864 = vpop.f32.mrf.mxu0
        %v865 = vadd.f32 %v842, %v864
        %866 = vdwg.mxu0
        %v867 = vxor.u32 %v793, 2147483648
        %v868 = vxor.u32 %v862, 2147483648
        %v869 = vxor.u32 %v796, 2147483648
        %v870 = vxor.u32 %v865, 2147483648
        %v871 = vmul.f32 %v867, 1.442695
        %v872 = vpow.pop %v871
        %v873 = vmul.f32 %v868, 1.442695
        %v874 = vpow.pop %v873
        %v875 = vmul.f32 %v869, 1.442695
        %v876 = vpow.pop %v875
        %v877 = vmul.f32 %v870, 1.442695
        %v878 = vpow.pop %v877
        %v879 = vadd.f32 %v872, 1.0
        %v880 = vadd.f32 %v874, 1.0
        %v881 = vadd.f32 %v876, 1.0
        %v882 = vadd.f32 %v878, 1.0
        %v883 = vrcp.pop %v879
        %v884 = vmul.f32 %v879, %v883
        %v885 = vsub.f32 1.0, %v884
        %v886 = vmul.f32 %v883, %v885
        %v887 = vadd.f32 %v883, %v886
        %vm888 = vweird.f32 %v879
        %vm889 = vweird.f32 %v883
        %vm890 = vmor %vm888, %vm889
        %v891 = vsel %vm890, %v883, %v887
        %v892 = vand.u32 2147483647, %v879
        %vm893 = vcmp.eq.f32.partialorder %v892, 8.507059e+37
        %v894 = vand.u32 %v879, 2147483648
        %v895 = vor.u32 1.1754944e-38, %v894
        %v896 = vsel %vm893, %v895, %v891
        %v897 = vmul.f32 1.0, %v896
        %v898 = vrcp.pop %v880
        %v899 = vmul.f32 %v880, %v898
        %v900 = vsub.f32 1.0, %v899
        %v901 = vmul.f32 %v898, %v900
        %v902 = vadd.f32 %v898, %v901
        %vm903 = vweird.f32 %v880
        %vm904 = vweird.f32 %v898
        %vm905 = vmor %vm903, %vm904
        %v906 = vsel %vm905, %v898, %v902
        %v907 = vand.u32 2147483647, %v880
        %vm908 = vcmp.eq.f32.partialorder %v907, 8.507059e+37
        %v909 = vand.u32 %v880, 2147483648
        %v910 = vor.u32 1.1754944e-38, %v909
        %v911 = vsel %vm908, %v910, %v906
        %v912 = vmul.f32 1.0, %v911
        %v913 = vrcp.pop %v881
        %v914 = vmul.f32 %v881, %v913
        %v915 = vsub.f32 1.0, %v914
        %v916 = vmul.f32 %v913, %v915
        %v917 = vadd.f32 %v913, %v916
        %vm918 = vweird.f32 %v881
        %vm919 = vweird.f32 %v913
        %vm920 = vmor %vm918, %vm919
        %v921 = vsel %vm920, %v913, %v917
        %v922 = vand.u32 2147483647, %v881
        %vm923 = vcmp.eq.f32.partialorder %v922, 8.507059e+37
        %v924 = vand.u32 %v881, 2147483648
        %v925 = vor.u32 1.1754944e-38, %v924
        %v926 = vsel %vm923, %v925, %v921
        %v927 = vmul.f32 1.0, %v926
        %v928 = vrcp.pop %v882
        %v929 = vmul.f32 %v882, %v928
        %v930 = vsub.f32 1.0, %v929
        %v931 = vmul.f32 %v928, %v930
        %v932 = vadd.f32 %v928, %v931
        %vm933 = vweird.f32 %v882
        %vm934 = vweird.f32 %v928
        %vm935 = vmor %vm933, %vm934
        %v936 = vsel %vm935, %v928, %v932
        %v937 = vand.u32 2147483647, %v882
        %vm938 = vcmp.eq.f32.partialorder %v937, 8.507059e+37
        %v939 = vand.u32 %v882, 2147483648
        %v940 = vor.u32 1.1754944e-38, %v939
        %v941 = vsel %vm938, %v940, %v936
        %v942 = vmul.f32 1.0, %v941
        %v943 = vmul.f32 %v912, %v723
        %v944 = vmul.f32 %v942, %v724
        %945 = vst [vmem:[#allocation2 + $0x8] sm:$0xff] %v943
        %946 = vst [vmem:[#allocation2 + $0x10] sm:$0xff] %v944
        %v947 = vld [vmem:[#allocation2 + $0x7] sm:$0xff]
        %v948 = vld [vmem:[#allocation2 + $0xf] sm:$0xff]
        %v949 = vld [vmem:[#allocation2 + $0x8] sm:$0xff]
        %v950 = vld [vmem:[#allocation2 + $0x10] sm:$0xff]
        %v951 = vld [vmem:[#allocation2 + $0x9] sm:$0xff]
        %v952 = vld [vmem:[#allocation2 + $0x11] sm:$0xff]
        %953 = vmatpush.msra.mxu0 %v364
        %954 = vmatpush.msra.mxu0 %v363
        %955 = vmatpush.msra.mxu0 %v362
        %956 = vmatpush.msra.mxu0 %v361
        %957 = vmatpush.msra.mxu0 %v360
        %958 = vmatpush.msra.mxu0 %v359
        %959 = vmatpush.msra.mxu0 %v358
        %960 = vmatpush.msra.mxu0 %v357
        %961 = vmatpush.msra.mxu0 %v356
        %962 = vmatpush.msra.mxu0 %v355
        %963 = vmatpush.msra.mxu0 %v354
        %964 = vmatpush.msra.mxu0 %v353
        %965 = vmatpush.msra.mxu0 %v352
        %966 = vmatpush.msra.mxu0 %v351
        %967 = vmatpush.msra.mxu0 %v350
        %968 = vmatpush.msra.mxu0 %v349
        %969 = vmatmul.f32.gmra.mxu0 %v947
        %v970 = vpop.f32.mrf.mxu0
        %v971 = vadd.f32 %v719, %v970
        %972 = vmatmul.f32.gmra.mxu0 %v948
        %v973 = vpop.f32.mrf.mxu0
        %v974 = vadd.f32 %v722, %v973
        %975 = vdwg.mxu0
        %976 = vmatpush.msra.mxu0 %v380
        %977 = vmatpush.msra.mxu0 %v379
        %978 = vmatpush.msra.mxu0 %v378
        %979 = vmatpush.msra.mxu0 %v377
        %980 = vmatpush.msra.mxu0 %v376
        %981 = vmatpush.msra.mxu0 %v375
        %982 = vmatpush.msra.mxu0 %v374
        %983 = vmatpush.msra.mxu0 %v373
        %984 = vmatpush.msra.mxu0 %v372
        %985 = vmatpush.msra.mxu0 %v371
        %986 = vmatpush.msra.mxu0 %v370
        %987 = vmatpush.msra.mxu0 %v369
        %988 = vmatpush.msra.mxu0 %v368
        %989 = vmatpush.msra.mxu0 %v367
        %990 = vmatpush.msra.mxu0 %v366
        %991 = vmatpush.msra.mxu0 %v365
        %992 = vmatmul.f32.gmra.mxu0 %v949
        %v993 = vpop.f32.mrf.mxu0
        %v994 = vadd.f32 %v971, %v993
        %995 = vmatmul.f32.gmra.mxu0 %v950
        %v996 = vpop.f32.mrf.mxu0
        %v997 = vadd.f32 %v974, %v996
        %998 = vdwg.mxu0
        %999 = vmatpush.msra.mxu0 %v396
        %1000 = vmatpush.msra.mxu0 %v395
        %1001 = vmatpush.msra.mxu0 %v394
        %1002 = vmatpush.msra.mxu0 %v393
        %1003 = vmatpush.msra.mxu0 %v392
        %1004 = vmatpush.msra.mxu0 %v391
        %1005 = vmatpush.msra.mxu0 %v390
        %1006 = vmatpush.msra.mxu0 %v389
        %1007 = vmatpush.msra.mxu0 %v388
        %1008 = vmatpush.msra.mxu0 %v387
        %1009 = vmatpush.msra.mxu0 %v386
        %1010 = vmatpush.msra.mxu0 %v385
        %1011 = vmatpush.msra.mxu0 %v384
        %1012 = vmatpush.msra.mxu0 %v383
        %1013 = vmatpush.msra.mxu0 %v382
        %1014 = vmatpush.msra.mxu0 %v381
        %1015 = vmatmul.f32.gmra.mxu0 %v951
        %v1016 = vpop.f32.mrf.mxu0
        %v1017 = vadd.f32 %v994, %v1016
        %1018 = vmatmul.f32.gmra.mxu0 %v952
        %v1019 = vpop.f32.mrf.mxu0
        %v1020 = vadd.f32 %v997, %v1019
        %1021 = vdwg.mxu0
        %v1022 = vtanh.pop %v1017
        %v1023 = vtanh.pop %v1020
        %v1024 = vsub.f32 1.0, %v897
        %v1025 = vsub.f32 1.0, %v927
        %v1026 = vmul.f32 %v1024, %v723
        %v1027 = vmul.f32 %v1025, %v724
        %v1028 = vmul.f32 %v897, %v1022
        %v1029 = vmul.f32 %v927, %v1023
        %v1030 = vadd.f32 %v1026, %v1028
        %v1031 = vadd.f32 %v1027, %v1029
        %1032 = vst [vmem:[#allocation2 + $0x8] sm:$0xff] %v1030
        %1033 = vst [vmem:[#allocation2 + $0x10] sm:$0xff] %v1031
        %s1034 = scalar_lea.vmem %s242, 16 [#allocation9]
        %1035 = vst [vmem:[%s1034] sm:$0xff] %v1030
        %1036 = vst [vmem:[%s1034 + $0x8] sm:$0xff] %v1031
        %s1037 = sand.u32 %s113, 1
        %s1038 = scalar_lea.sflag [#allocation5], %s1037
        %s1039 = sand.u32 %s113, 1
        %s1040 = smul.addr %s1039, 32
        %s1041 = scalar_lea.vmem [#allocation9], %s1040
        // Predicated region
        $region49: #{tpu_custom_call.1} parent=31 // pred_check
          %p1042 = pneg %p123
        $region50: #{tpu_custom_call.1} parent=31 // pred_check_branch
          %1044 = sbr.rel (%p1042) target = $region52
        $region51: #{tpu_custom_call.1} parent=31 // pred_region
          %s1045 = smul.u32 2, %s26
          %1047 = vsyncadd %s1038, 0
          %s1048 = smul.addr %s1045, 2
          %s1049 = smul.addr %s25, 8
          %s1050 = sadd.s32 %s1048, %s1049
          %s1051 = smul.addr %s1050, 8
          %s1052 = scalar_lea.hbm %s3, %s1051
          %s1053 = sshll.u32 %s1041, 4
          %s1054 = int_to_ptr.vmem [resolvable:$true] %s1053
          %s1055 = sshll.u32 %s1052, 4
          %s1056 = int_to_ptr.hbm [resolvable:$true] %s1055
          %1061 = dma.vmem_to_hbm [thread:$0]  %s1054, 512, %s1056, %s1038, 128, 128, 8
        $region52: #{tpu_custom_call.1} parent=31 // pred_fallthru
          _
      $region32: #{tpu_custom_call.1} parent=5 // pred_fallthru
        _
      %p1062 = scmp.le.s32.totalorder 2, %s16
      // Predicated region
      $region53: #{tpu_custom_call.1} parent=5 // pred_check
        %p1063 = pneg %p1062
      $region54: #{tpu_custom_call.1} parent=5 // pred_check_branch
        %1065 = sbr.rel (%p1063) target = $region56
      $region55: #{tpu_custom_call.1} parent=5 // pred_region
        %s1066 = ssub.s32 %s16, 2
        // Predicated region
        $region57: #{tpu_custom_call.1} parent=55 // pred_check
          %p1067 = pneg %p129
        $region58: #{tpu_custom_call.1} parent=55 // pred_check_branch
          %1069 = sbr.rel (%p1067) target = $region60
        $region59: #{tpu_custom_call.1} parent=55 // pred_region
          %s1070 = sand.u32 %s114, 1
          %s1071 = scalar_lea.sflag [#allocation5], %s1070
          %s1072 = sand.u32 %s114, 1
          %s1073 = smul.addr %s1072, 32
          %s1074 = scalar_lea.vmem [#allocation9], %s1073
          %1076 = dma.done %s1071, 512
        $region60: #{tpu_custom_call.1} parent=55 // pred_fallthru
          _
      $region56: #{tpu_custom_call.1} parent=5 // pred_fallthru
        _
    $region6: #{tpu_custom_call.1} parent=1 // loop_footer
      %s20 = sadd.s32 1, %s16
    $region7: #{tpu_custom_call.1} parent=1 // loop_footer_branch
      %15 = sbr.rel target = $region3
    $region8: #{tpu_custom_call.1} parent=1 // loop_exit
      _
    %1077 = vsyncpa [#allocation4], 1
    %s1078 = scalar_lea.sflag [#allocation4], 1
    %1079 = vsyncpa %s1078, 1
    %1080 = vsyncpa [#allocation7], 1
    %1081 = vsyncpa [#allocation5], 1
    %s1082 = scalar_lea.sflag [#allocation5], 1
    %1083 = vsyncpa %s1082, 1

</llo_original>
